<compile_context>
chip_gen: v6e
topology: v6e:2x2x1
jax: 0.10.0
libtpu: 0.0.40
codegen_flags: <defaults>
</compile_context>

<pallas_src>
import functools

import jax
import jax.numpy as jnp
from jax.experimental import pallas as pl
from jax.experimental.pallas import tpu as pltpu

LN_EPS = 1e-5  # torch.nn.LayerNorm default


def _round_up(x, m):
    return ((x + m - 1) // m) * m


# ----------------------------------------------------------------------------
# One-time parameter repacking (hoisted out of the per-block loop).
# ----------------------------------------------------------------------------
def prepare_gru_params(params, *, compute_dtype=jnp.float32):
    """Pack GRU + LayerNorm parameters into two kernel-friendly slabs."""
    w_ih, w_hh = params["w_ih"], params["w_hh"]   # (D, 3D), torch gate order [r|z|n]
    b_ih, b_hh = params["b_ih"], params["b_hh"]   # (3D,)
    D = w_ih.shape[0]
    # Six (D, D) gate slabs stacked along the sublane axis:
    #   rows [0:D]=W_ir [D:2D]=W_hr [2D:3D]=W_iz [3D:4D]=W_hz [4D:5D]=W_in [5D:6D]=W_hn
    w_packed = jnp.concatenate(
        [w_ih[:, 0 * D:1 * D], w_hh[:, 0 * D:1 * D],
         w_ih[:, 1 * D:2 * D], w_hh[:, 1 * D:2 * D],
         w_ih[:, 2 * D:3 * D], w_hh[:, 2 * D:3 * D]],
        axis=0).astype(compute_dtype)                               # (6D, D)
    # Biases + LayerNorm params packed into one (8, D) slab:
    #   row 0 = b_r (ih+hh)  row 1 = b_z (ih+hh)  row 2 = b_in  row 3 = b_hn
    #   row 4 = ln_gamma     row 5 = ln_beta      rows 6-7 = padding
    p_packed = jnp.zeros((8, D), jnp.float32)
    p_packed = p_packed.at[0].set(b_ih[0 * D:1 * D] + b_hh[0 * D:1 * D])
    p_packed = p_packed.at[1].set(b_ih[1 * D:2 * D] + b_hh[1 * D:2 * D])
    p_packed = p_packed.at[2].set(b_ih[2 * D:3 * D])
    p_packed = p_packed.at[3].set(b_hh[2 * D:3 * D])
    p_packed = p_packed.at[4].set(params["ln_gamma"].astype(jnp.float32))
    p_packed = p_packed.at[5].set(params["ln_beta"].astype(jnp.float32))
    return {"w": w_packed, "p": p_packed,
            "compute_dtype": compute_dtype, "D": D}


# ----------------------------------------------------------------------------
# Pallas kernel: single-step GRU cell + LayerNorm for one tile of dst nodes
# ----------------------------------------------------------------------------
def _gru_ln_kernel(D, x_ref, h0_ref, w_ref, p_ref, o_ref):
    wdt = w_ref.dtype                       # MXU input dtype (f32 or bf16)
    x = x_ref[...]                          # (tile, D) already in compute dtype
    h0 = h0_ref[...]                        # (tile, D) f32 (blend / LN precision)
    h0_mm = h0.astype(wdt)

    def mm(lhs, slab):                      # gate slab matmul, f32 accumulation
        w = w_ref[slab * D:(slab + 1) * D, :]
        return jnp.dot(lhs, w, preferred_element_type=jnp.float32)

    r = jax.nn.sigmoid(mm(x, 0) + mm(h0_mm, 1) + p_ref[0:1, :])
    z = jax.nn.sigmoid(mm(x, 2) + mm(h0_mm, 3) + p_ref[1:2, :])
    n = jnp.tanh(mm(x, 4) + p_ref[2:3, :] + r * (mm(h0_mm, 5) + p_ref[3:4, :]))
    h_new = n + z * (h0 - n)                # == (1 - z) * n + z * h0

    # LayerNorm over the hidden dim (biased variance, matches torch)
    mean = jnp.mean(h_new, axis=-1, keepdims=True)
    ctr = h_new - mean
    var = jnp.mean(ctr * ctr, axis=-1, keepdims=True)
    h_norm = ctr * jax.lax.rsqrt(var + LN_EPS)

    # Dropout is identity in eval mode.
    o_ref[...] = h_norm * p_ref[4:5, :] + p_ref[5:6, :]


# ----------------------------------------------------------------------------
# Wrapper: gather (glue) + GRU reducer kernel
# ----------------------------------------------------------------------------
def gru_reduce_pallas(node_feat, nbr_idx, prepped, *, tile_n=512):
    """node_feat: (N_src, D) f32; nbr_idx: (N_dst, L) int32 mailbox indices."""
    N, L = nbr_idx.shape
    D = prepped["D"]
    compute_dtype = prepped["compute_dtype"]

    if L == 1:
        # Torch path: `return {'ft': msg.squeeze(1)}` (no GRU, no LayerNorm).
        return node_feat[nbr_idx[:, 0]]

    itemsize_c = jnp.dtype(compute_dtype).itemsize
    row_align = 8 * (4 // itemsize_c)       # sublane alignment of narrowest stream

    # --- tile sizing ----------------------------------------------------------
    # Keep the per-step node stream modest and aim for >= 2 grid steps so both
    # v7x TensorCores get work (costs nothing on single-TC v5e/v6e).
    row_bytes = D * (itemsize_c + 4 + 4)    # x + h0 + out per node row
    tile_cap = max(row_align,
                   ((6 * 2 ** 20) // max(row_bytes, 1)) // row_align * row_align)
    tile_n = min(tile_n, tile_cap)
    n_al = _round_up(N, row_align)
    tile = min(tile_n, max(row_align, _round_up(pl.cdiv(n_al, 2), row_align)))
    n_pad = _round_up(N, tile)

    # --- pad-in-gather: pad index rows (gather row 0), not the activations ---
    idx = nbr_idx
    if n_pad != N:
        idx = jnp.concatenate(
            [idx, jnp.zeros((n_pad - N, L), idx.dtype)], axis=0)

    # Mailbox reduction fused with the gather (plain-JAX glue standing in for
    # DGL's update_all/copy_u bucketing):
    #   x  = msg[:, -1, :]                 (current_input, matmul LHS only)
    #   h0 = sum(msg[:, :-1, :], axis=1)   (f_sum, kept f32 for blend/LN)
    x = node_feat[idx[:, -1]].astype(compute_dtype)                 # (n_pad, D)
    h0 = jnp.sum(node_feat[idx[:, :-1]], axis=1, dtype=jnp.float32)  # (n_pad, D)

    # --- VMEM budget: v7x has 64 MiB physical VMEM; keep the cap there --------
    est = 2 * tile * row_bytes + 2 * (6 * D * D * itemsize_c + 8 * D * 4)
    vmem_limit = int(min(max(32 * 2 ** 20, 6 * est), 64 * 2 ** 20))

    grid_spec = pltpu.PrefetchScalarGridSpec(
        num_scalar_prefetch=0,
        grid=(n_pad // tile,),
        in_specs=[
            pl.BlockSpec((tile, D), lambda i: (i, 0)),     # x  (compute dtype)
            pl.BlockSpec((tile, D), lambda i: (i, 0)),     # h0 (f32)
            # TODO(synk): pipeline_mode=pl.Buffered(1) on the two constant
            # blocks below would halve their VMEM (never re-fetched).
            pl.BlockSpec((6 * D, D), lambda i: (0, 0)),    # packed gate weights
            pl.BlockSpec((8, D), lambda i: (0, 0)),        # packed biases + LN
        ],
        out_specs=pl.BlockSpec((tile, D), lambda i: (i, 0)),
    )
    # TODO(synk): for D < 128 the (tile, D) output stores are lane-masked; a
    # lane-dense (tile//(128//D), 128) output slab (wrapper reshape back) would
    # densify stores but needs an in-kernel sublane->lane relayout; skipped to
    # keep lowering simple and portable across v5e/v6e/v7x.
    out = pl.pallas_call(
        functools.partial(_gru_ln_kernel, D),
        out_shape=jax.ShapeDtypeStruct((n_pad, D), jnp.float32),
        grid_spec=grid_spec,
        compiler_params=pltpu.CompilerParams(
            dimension_semantics=("parallel",),
            vmem_limit_bytes=vmem_limit),
    )(x, h0, prepped["w"], prepped["p"])
    return out[:N]


# ----------------------------------------------------------------------------
# Plain-JAX reference (correctness check)
# ----------------------------------------------------------------------------
def gru_reducer_ref(msg, params):
    N, L, D = msg.shape
    if L == 1:
        return msg[:, 0, :]
    x = msg[:, -1, :]
    h0 = jnp.sum(msg[:, :-1, :], axis=1)
    gi = x @ params["w_ih"] + params["b_ih"]
    gh = h0 @ params["w_hh"] + params["b_hh"]
    i_r, i_z, i_n = gi[:, :D], gi[:, D:2 * D], gi[:, 2 * D:]
    h_r, h_z, h_n = gh[:, :D], gh[:, D:2 * D], gh[:, 2 * D:]
    r = jax.nn.sigmoid(i_r + h_r)
    z = jax.nn.sigmoid(i_z + h_z)
    n = jnp.tanh(i_n + r * h_n)
    h_new = (1.0 - z) * n + z * h0
    mean = jnp.mean(h_new, axis=-1, keepdims=True)
    var = jnp.mean((h_new - mean) ** 2, axis=-1, keepdims=True)
    h_norm = (h_new - mean) * jax.lax.rsqrt(var + LN_EPS)
    return h_norm * params["ln_gamma"] + params["ln_beta"]


# ----------------------------------------------------------------------------
# GTEConv forward over a list of "blocks"
# ----------------------------------------------------------------------------
def gte_conv_forward(blocks, params, *, use_pallas=True,
                     compute_dtype=jnp.float32, tile_n=512):
    """blocks: list of dicts with keys
         'src_tokens' (only block 0), 'dst_tokens' (N_dst,),
         'nbr_idx' (N_dst, L)  -- indices into that block's source-feature rows.
       The last mailbox slot (nbr_idx[:, -1]) plays the role of `current_input`.
    """
    emb = params["embedding"]
    prepped = (prepare_gru_params(params, compute_dtype=compute_dtype)
               if use_pallas else None)
    rst_features = None
    for idx, block in enumerate(blocks):
        h_dst = emb[block["dst_tokens"]]                      # (N_dst, D)
        if idx == 0:
            node_feat = emb[block["src_tokens"]]              # (N_src, D)
        else:
            # torch.cat((h_dst, src_feat), dim=0)
            node_feat = jnp.concatenate([h_dst, rst_features], axis=0)
        # TODO(synk): DGL update_all/copy_u mailbox bucketing is simulated with
        # a dense fixed-degree neighbor-index gather (plain-JAX glue).
        if use_pallas:
            rst_features = gru_reduce_pallas(node_feat, block["nbr_idx"],
                                             prepped, tile_n=tile_n)
        else:
            msg = node_feat[block["nbr_idx"]]                 # (N_dst, L, D)
            rst_features = gru_reducer_ref(msg, params)
    return rst_features


# ----------------------------------------------------------------------------
# Deterministic parameter / input construction
# ----------------------------------------------------------------------------
def make_params(key, hidden_dim, vocab_size):
    ks = jax.random.split(key, 7)
    s = 0.1
    return {
        "embedding": jax.random.normal(ks[0], (vocab_size, hidden_dim), jnp.float32) * s,
        # stored pre-transposed: (D, 3D), gate order [r | z | n] (torch layout)
        "w_ih": jax.random.normal(ks[1], (hidden_dim, 3 * hidden_dim), jnp.float32) * s,
        "w_hh": jax.random.normal(ks[2], (hidden_dim, 3 * hidden_dim), jnp.float32) * s,
        "b_ih": jax.random.normal(ks[3], (3 * hidden_dim,), jnp.float32) * s,
        "b_hh": jax.random.normal(ks[4], (3 * hidden_dim,), jnp.float32) * s,
        "ln_gamma": jnp.ones((hidden_dim,), jnp.float32),
        "ln_beta": jnp.zeros((hidden_dim,), jnp.float32),
    }


if __name__ == "__main__":
    hidden_dim = 32
    vocab_size = 50

    key = jax.random.PRNGKey(0)
    k_par, k_b0s, k_b0d, k_b0n, k_b1d, k_b1n = jax.random.split(key, 6)
    params = make_params(k_par, hidden_dim, vocab_size)

    # Block 0: 24 source nodes, 16 destination nodes, in-degree 4
    n_src0, n_dst0, deg0 = 24, 16, 4
    block0 = {
        "src_tokens": jax.random.randint(k_b0s, (n_src0,), 0, vocab_size),
        "dst_tokens": jax.random.randint(k_b0d, (n_dst0,), 0, vocab_size),
        "nbr_idx": jax.random.randint(k_b0n, (n_dst0, deg0), 0, n_src0),
    }
    # Block 1: sources = [emb(dst_tokens1); rst0] -> n_dst1 + n_dst0 rows, in-degree 3
    n_dst1, deg1 = 8, 3
    block1 = {
        "dst_tokens": jax.random.randint(k_b1d, (n_dst1,), 0, vocab_size),
        "nbr_idx": jax.random.randint(k_b1n, (n_dst1, deg1), 0, n_dst1 + n_dst0),
    }
    blocks = [block0, block1]

    ref = gte_conv_forward(blocks, params, use_pallas=False)
    ref = jax.block_until_ready(ref)

    # f32 MXU path (matches the reference tightly)
    out_f32 = gte_conv_forward(blocks, params, use_pallas=True,
                               compute_dtype=jnp.float32)
    out_f32 = jax.block_until_ready(out_f32)
    assert out_f32.shape == (n_dst1, hidden_dim)
    assert jnp.allclose(out_f32, ref, atol=1e-5, rtol=1e-5), "f32 mismatch vs reference"

    # bf16-weight/LHS MXU path (v6e/v7x recommendation) -- f32 accumulation,
    # f32 h0/gate math and f32 LayerNorm, so only matmul inputs are rounded.
    out_bf16 = gte_conv_forward(blocks, params, use_pallas=True,
                                compute_dtype=jnp.bfloat16)
    out_bf16 = jax.block_until_ready(out_bf16)
    assert out_bf16.shape == (n_dst1, hidden_dim)
    assert jnp.allclose(out_bf16, ref, atol=5e-2, rtol=5e-2), "bf16 mismatch vs reference"

    print("KERNEL_OK")
</pallas_src>

<mosaic_0001>
module attributes {stable_mosaic.version = 11 : i64} {
  func.func @_gru_ln_kernel(%arg0: i32, %arg1: memref<8x32xf32, #tpu.memory_space<vmem>>, %arg2: memref<8x32xf32, #tpu.memory_space<vmem>>, %arg3: memref<192x32xf32, #tpu.memory_space<vmem>>, %arg4: memref<8x32xf32, #tpu.memory_space<vmem>>, %arg5: memref<8x32xf32, #tpu.memory_space<vmem>>) attributes {dimension_semantics = [#tpu.dimension_semantics<parallel>], iteration_bounds = array<i64: 2>, scalar_prefetch = 0 : i64, scratch_operands = 0 : i64, tpu.core_type = #tpu.core_type<tc>, window_params = [{transform_indices = @transform_0, window_bounds = array<i64: 8, 32>}, {transform_indices = @transform_1, window_bounds = array<i64: 8, 32>}, {pipeline_mode = #tpu.pipeline_mode<synchronous>, transform_indices = @transform_2, window_bounds = array<i64: 192, 32>}, {pipeline_mode = #tpu.pipeline_mode<synchronous>, transform_indices = @transform_3, window_bounds = array<i64: 8, 32>}, {transform_indices = @transform_4, window_bounds = array<i64: 8, 32>}]} {
    %c0 = arith.constant 0 : index
    %c0_0 = arith.constant 0 : index
    %0 = vector.load %arg1[%c0, %c0_0] : memref<8x32xf32, #tpu.memory_space<vmem>>, vector<8x32xf32>
    %c0_1 = arith.constant 0 : index
    %c0_2 = arith.constant 0 : index
    %1 = vector.load %arg2[%c0_1, %c0_2] : memref<8x32xf32, #tpu.memory_space<vmem>>, vector<8x32xf32>
    %c0_3 = arith.constant 0 : index
    %c0_4 = arith.constant 0 : index
    %2 = vector.load %arg3[%c0_3, %c0_4] : memref<192x32xf32, #tpu.memory_space<vmem>>, vector<32x32xf32>
    %cst = arith.constant dense<0.000000e+00> : vector<8x32xf32>
    %3 = tpu.matmul %0, %2, %cst {dimension_numbers = #tpu.dot_dimension_numbers<[1], [0], [0], [1], [0, 0, 1, 1], [], []>} : vector<8x32xf32>, vector<32x32xf32>, vector<8x32xf32> -> vector<8x32xf32>
    %c32 = arith.constant 32 : index
    %c0_5 = arith.constant 0 : index
    %4 = vector.load %arg3[%c32, %c0_5] : memref<192x32xf32, #tpu.memory_space<vmem>>, vector<32x32xf32>
    %cst_6 = arith.constant dense<0.000000e+00> : vector<8x32xf32>
    %5 = tpu.matmul %1, %4, %cst_6 {dimension_numbers = #tpu.dot_dimension_numbers<[1], [0], [0], [1], [0, 0, 1, 1], [], []>} : vector<8x32xf32>, vector<32x32xf32>, vector<8x32xf32> -> vector<8x32xf32>
    %6 = arith.addf %3, %5 : vector<8x32xf32>
    %c0_7 = arith.constant 0 : index
    %c0_8 = arith.constant 0 : index
    %7 = vector.load %arg4[%c0_7, %c0_8] : memref<8x32xf32, #tpu.memory_space<vmem>>, vector<1x32xf32>
    %8 = vector.broadcast %7 : vector<1x32xf32> to vector<8x32xf32>
    %9 = arith.addf %6, %8 : vector<8x32xf32>
    %10 = arith.negf %9 : vector<8x32xf32>
    %11 = math.exp %10 : vector<8x32xf32>
    %cst_9 = arith.constant 1.000000e+00 : f32
    %12 = vector.broadcast %cst_9 : f32 to vector<8x32xf32>
    %13 = arith.addf %12, %11 : vector<8x32xf32>
    %14 = arith.divf %12, %13 : vector<8x32xf32>
    %c64 = arith.constant 64 : index
    %c0_10 = arith.constant 0 : index
    %15 = vector.load %arg3[%c64, %c0_10] : memref<192x32xf32, #tpu.memory_space<vmem>>, vector<32x32xf32>
    %cst_11 = arith.constant dense<0.000000e+00> : vector<8x32xf32>
    %16 = tpu.matmul %0, %15, %cst_11 {dimension_numbers = #tpu.dot_dimension_numbers<[1], [0], [0], [1], [0, 0, 1, 1], [], []>} : vector<8x32xf32>, vector<32x32xf32>, vector<8x32xf32> -> vector<8x32xf32>
    %c96 = arith.constant 96 : index
    %c0_12 = arith.constant 0 : index
    %17 = vector.load %arg3[%c96, %c0_12] : memref<192x32xf32, #tpu.memory_space<vmem>>, vector<32x32xf32>
    %cst_13 = arith.constant dense<0.000000e+00> : vector<8x32xf32>
    %18 = tpu.matmul %1, %17, %cst_13 {dimension_numbers = #tpu.dot_dimension_numbers<[1], [0], [0], [1], [0, 0, 1, 1], [], []>} : vector<8x32xf32>, vector<32x32xf32>, vector<8x32xf32> -> vector<8x32xf32>
    %19 = arith.addf %16, %18 : vector<8x32xf32>
    %c1 = arith.constant 1 : index
    %c0_14 = arith.constant 0 : index
    %20 = vector.load %arg4[%c1, %c0_14] : memref<8x32xf32, #tpu.memory_space<vmem>>, vector<1x32xf32>
    %21 = vector.broadcast %20 : vector<1x32xf32> to vector<8x32xf32>
    %22 = arith.addf %19, %21 : vector<8x32xf32>
    %23 = arith.negf %22 : vector<8x32xf32>
    %24 = math.exp %23 : vector<8x32xf32>
    %cst_15 = arith.constant 1.000000e+00 : f32
    %25 = vector.broadcast %cst_15 : f32 to vector<8x32xf32>
    %26 = arith.addf %25, %24 : vector<8x32xf32>
    %27 = arith.divf %25, %26 : vector<8x32xf32>
    %c128 = arith.constant 128 : index
    %c0_16 = arith.constant 0 : index
    %28 = vector.load %arg3[%c128, %c0_16] : memref<192x32xf32, #tpu.memory_space<vmem>>, vector<32x32xf32>
    %cst_17 = arith.constant dense<0.000000e+00> : vector<8x32xf32>
    %29 = tpu.matmul %0, %28, %cst_17 {dimension_numbers = #tpu.dot_dimension_numbers<[1], [0], [0], [1], [0, 0, 1, 1], [], []>} : vector<8x32xf32>, vector<32x32xf32>, vector<8x32xf32> -> vector<8x32xf32>
    %c2 = arith.constant 2 : index
    %c0_18 = arith.constant 0 : index
    %30 = vector.load %arg4[%c2, %c0_18] : memref<8x32xf32, #tpu.memory_space<vmem>>, vector<1x32xf32>
    %31 = vector.broadcast %30 : vector<1x32xf32> to vector<8x32xf32>
    %32 = arith.addf %29, %31 : vector<8x32xf32>
    %c160 = arith.constant 160 : index
    %c0_19 = arith.constant 0 : index
    %33 = vector.load %arg3[%c160, %c0_19] : memref<192x32xf32, #tpu.memory_space<vmem>>, vector<32x32xf32>
    %cst_20 = arith.constant dense<0.000000e+00> : vector<8x32xf32>
    %34 = tpu.matmul %1, %33, %cst_20 {dimension_numbers = #tpu.dot_dimension_numbers<[1], [0], [0], [1], [0, 0, 1, 1], [], []>} : vector<8x32xf32>, vector<32x32xf32>, vector<8x32xf32> -> vector<8x32xf32>
    %c3 = arith.constant 3 : index
    %c0_21 = arith.constant 0 : index
    %35 = vector.load %arg4[%c3, %c0_21] : memref<8x32xf32, #tpu.memory_space<vmem>>, vector<1x32xf32>
    %36 = vector.broadcast %35 : vector<1x32xf32> to vector<8x32xf32>
    %37 = arith.addf %34, %36 : vector<8x32xf32>
    %38 = arith.mulf %14, %37 : vector<8x32xf32>
    %39 = arith.addf %32, %38 : vector<8x32xf32>
    %40 = math.tanh %39 : vector<8x32xf32>
    %41 = arith.subf %1, %40 : vector<8x32xf32>
    %42 = arith.mulf %27, %41 : vector<8x32xf32>
    %43 = arith.addf %40, %42 : vector<8x32xf32>
    %cst_22 = arith.constant dense<0.000000e+00> : vector<8xf32>
    %44 = vector.multi_reduction <add>, %43, %cst_22 [1] : vector<8x32xf32> to vector<8xf32>
    %45 = vector.shape_cast %44 : vector<8xf32> to vector<8x1xf32>
    %cst_23 = arith.constant 3.200000e+01 : f32
    %46 = vector.broadcast %cst_23 : f32 to vector<8x1xf32>
    %47 = arith.divf %45, %46 : vector<8x1xf32>
    %48 = vector.broadcast %47 : vector<8x1xf32> to vector<8x32xf32>
    %49 = arith.subf %43, %48 : vector<8x32xf32>
    %50 = arith.mulf %49, %49 : vector<8x32xf32>
    %cst_24 = arith.constant dense<0.000000e+00> : vector<8xf32>
    %51 = vector.multi_reduction <add>, %50, %cst_24 [1] : vector<8x32xf32> to vector<8xf32>
    %52 = vector.shape_cast %51 : vector<8xf32> to vector<8x1xf32>
    %cst_25 = arith.constant 3.200000e+01 : f32
    %53 = vector.broadcast %cst_25 : f32 to vector<8x1xf32>
    %54 = arith.divf %52, %53 : vector<8x1xf32>
    %cst_26 = arith.constant 9.99999974E-6 : f32
    %55 = vector.broadcast %cst_26 : f32 to vector<8x1xf32>
    %56 = arith.addf %54, %55 : vector<8x1xf32>
    %57 = math.rsqrt %56 : vector<8x1xf32>
    %58 = vector.broadcast %57 : vector<8x1xf32> to vector<8x32xf32>
    %59 = arith.mulf %49, %58 : vector<8x32xf32>
    %c4 = arith.constant 4 : index
    %c0_27 = arith.constant 0 : index
    %60 = vector.load %arg4[%c4, %c0_27] : memref<8x32xf32, #tpu.memory_space<vmem>>, vector<1x32xf32>
    %61 = vector.broadcast %60 : vector<1x32xf32> to vector<8x32xf32>
    %62 = arith.mulf %59, %61 : vector<8x32xf32>
    %c5 = arith.constant 5 : index
    %c0_28 = arith.constant 0 : index
    %63 = vector.load %arg4[%c5, %c0_28] : memref<8x32xf32, #tpu.memory_space<vmem>>, vector<1x32xf32>
    %64 = vector.broadcast %63 : vector<1x32xf32> to vector<8x32xf32>
    %65 = arith.addf %62, %64 : vector<8x32xf32>
    %c0_29 = arith.constant 0 : index
    %c0_30 = arith.constant 0 : index
    %66 = vector.load %arg5[%c0_29, %c0_30] : memref<8x32xf32, #tpu.memory_space<vmem>>, vector<8x32xf32>
    tpu.vector_store %arg5[%c0_29, %c0_30], %65 {strides = array<i32>} : memref<8x32xf32, #tpu.memory_space<vmem>>, vector<8x32xf32>,
    return
  }
  func.func @transform_0(%arg0: i32) -> (i32, i32) {
    %c0_i32 = arith.constant 0 : i32
    %c0_i32_0 = arith.constant 0 : i32
    return %arg0, %c0_i32 : i32, i32
  }
  func.func @transform_1(%arg0: i32) -> (i32, i32) {
    %c0_i32 = arith.constant 0 : i32
    %c0_i32_0 = arith.constant 0 : i32
    return %arg0, %c0_i32 : i32, i32
  }
  func.func @transform_2(%arg0: i32) -> (i32, i32) {
    %c0_i32 = arith.constant 0 : i32
    %c0_i32_0 = arith.constant 0 : i32
    %c0_i32_1 = arith.constant 0 : i32
    return %c0_i32, %c0_i32_0 : i32, i32
  }
  func.func @transform_3(%arg0: i32) -> (i32, i32) {
    %c0_i32 = arith.constant 0 : i32
    %c0_i32_0 = arith.constant 0 : i32
    %c0_i32_1 = arith.constant 0 : i32
    return %c0_i32, %c0_i32_0 : i32, i32
  }
  func.func @transform_4(%arg0: i32) -> (i32, i32) {
    %c0_i32 = arith.constant 0 : i32
    %c0_i32_0 = arith.constant 0 : i32
    return %arg0, %c0_i32 : i32, i32
  }
}

</mosaic_0001>

<llo_original>
// kernel: tpu_custom_call.1
$region0: #{tpu_custom_call.1}
  #allocation0 [shape = 'u32[]', space=smem, size = 0x4, offset = 0x4, fixed_abs, tag = 'smem constant byte address 0x4 - core index']
  #allocation1 [shape = 'u32[144,128]{1,0:T(1,128)}', space=vmem, size = 0x12000, scoped, tag = 'internal scratch']
  %s0 = inlined_call_operand.vmem [shape: f32[16,32], index: 0, kind: input, shape index: {}]
  %s1 = inlined_call_operand.vmem [shape: f32[16,32], index: 1, kind: input, shape index: {}]
  %s2 = inlined_call_operand.vmem [shape: f32[192,32], index: 2, kind: input, shape index: {}]
  %s3 = inlined_call_operand.vmem [shape: f32[8,32], index: 3, kind: input, shape index: {}]
  %s4 = inlined_call_operand.hbm [shape: f32[16,32], index: 4, kind: output, shape index: {}]
  %s5 = sld [smem:[#allocation0]]
  $region49: #{tpu_custom_call.1} parent=0
    _
  %s7 = ssub.s32 1, %s5
  %s8 = scalar_select 0, %s7, %s5
  $region1: #{tpu_custom_call.1} parent=0
    #allocation2 [shape = 'u8[8192]{0}', space=vmem, size = 0x2000, scoped, tag = 'output window, operand 0']
    #allocation3 [shape = 's32[2]{0}', space=sflag, size = 0x8, scoped, tag = 'scoped memory for tpu_custom_call.1']
    %9 = vsyncpa [#allocation3], 0
    %s10 = scalar_lea.sflag [#allocation3], 1
    %11 = vsyncpa %s10, 0
    loop: start=0, step=1, limit=4
    $region2: #{tpu_custom_call.1} parent=1 // loop_pre_header
      _
    $region3: #{tpu_custom_call.1} parent=1 // loop_header
      %s13 = sphi 0, %s17
      %p14 = scmp.ge.s32.totalorder %s13, 4
      %s23 = sphi 0, %s25
      %s26 = sphi 0, %s23
      %s27 = sphi 0, %s26
      %s43 = sphi 0, %s27
      %s49 = sphi 0, %s51
      %s52 = sphi 0, %s49
      %s53 = sphi 0, %s52
      %s69 = sphi 0, %s53
      %s73 = sphi 0, %s73
      %s75 = sphi 0, %s73
      %s76 = sphi 0, %s75
      %s90 = sphi 0, %s76
      %s94 = sphi 0, %s94
      %s96 = sphi 0, %s94
      %s97 = sphi 0, %s96
      %s111 = sphi 0, %s97
      %s117 = sphi 0, %s119
      %s120 = sphi 0, %s117
      %s121 = sphi 0, %s120
      %s137 = sphi 0, %s121
    $region4: #{tpu_custom_call.1} parent=1 // loop_header_branch
      %16 = sbr.rel (%p14) target = $region8
    $region5: #{tpu_custom_call.1} parent=1 // loop_body
      %s18 = ssub.s32 %s13, 1
      %s19 = ssub.s32 %s13, 2
      %s20 = sadd.s32 %s13, 1
      %s21 = ssub.s32 %s13, %s20
      %p22 = scmp.eq.s32.totalorder %s21, 0
      %s24 = sadd.s32 %s23, 1
      %s25 = scalar_select %p22, %s23, %s24
      %p28 = pneg %p22
      %p29 = scmp.eq.s32.totalorder %s13, 1
      %p30 = por %p28, %p29
      %p31 = scmp.ne.s32.totalorder %s23, %s26
      %p32 = scmp.eq.s32.totalorder %s13, 0
      %p33 = por %p31, %p32
      %p34 = scmp.ne.s32.totalorder %s23, %s26
      %p35 = scmp.eq.s32.totalorder %s18, 1
      %p36 = por %p34, %p35
      %p37 = scmp.ne.s32.totalorder %s26, %s27
      %p38 = scmp.eq.s32.totalorder %s18, 0
      %p39 = por %p37, %p38
      %p40 = scmp.ne.s32.totalorder %s26, %s27
      %p41 = scmp.eq.s32.totalorder %s19, 1
      %p42 = por %p40, %p41
      %p44 = scmp.ne.s32.totalorder %s27, %s43
      %p45 = scmp.eq.s32.totalorder %s19, 0
      %p46 = por %p44, %p45
      %s47 = ssub.s32 %s13, %s20
      %p48 = scmp.eq.s32.totalorder %s47, 0
      %s50 = sadd.s32 %s49, 1
      %s51 = scalar_select %p48, %s49, %s50
      %p54 = pneg %p48
      %p55 = scmp.eq.s32.totalorder %s13, 1
      %p56 = por %p54, %p55
      %p57 = scmp.ne.s32.totalorder %s49, %s52
      %p58 = scmp.eq.s32.totalorder %s13, 0
      %p59 = por %p57, %p58
      %p60 = scmp.ne.s32.totalorder %s49, %s52
      %p61 = scmp.eq.s32.totalorder %s18, 1
      %p62 = por %p60, %p61
      %p63 = scmp.ne.s32.totalorder %s52, %s53
      %p64 = scmp.eq.s32.totalorder %s18, 0
      %p65 = por %p63, %p64
      %p66 = scmp.ne.s32.totalorder %s52, %s53
      %p67 = scmp.eq.s32.totalorder %s19, 1
      %p68 = por %p66, %p67
      %p70 = scmp.ne.s32.totalorder %s53, %s69
      %p71 = scmp.eq.s32.totalorder %s19, 0
      %p72 = por %p70, %p71
      %s74 = sadd.s32 %s73, 1
      %p77 = scmp.eq.s32.totalorder %s13, 1
      %p78 = scmp.ne.s32.totalorder %s73, %s75
      %p79 = scmp.eq.s32.totalorder %s13, 0
      %p80 = por %p78, %p79
      %p81 = scmp.ne.s32.totalorder %s73, %s75
      %p82 = scmp.eq.s32.totalorder %s18, 1
      %p83 = por %p81, %p82
      %p84 = scmp.ne.s32.totalorder %s75, %s76
      %p85 = scmp.eq.s32.totalorder %s18, 0
      %p86 = por %p84, %p85
      %p87 = scmp.ne.s32.totalorder %s75, %s76
      %p88 = scmp.eq.s32.totalorder %s19, 1
      %p89 = por %p87, %p88
      %p91 = scmp.ne.s32.totalorder %s76, %s90
      %p92 = scmp.eq.s32.totalorder %s19, 0
      %p93 = por %p91, %p92
      %s95 = sadd.s32 %s94, 1
      %p98 = scmp.eq.s32.totalorder %s13, 1
      %p99 = scmp.ne.s32.totalorder %s94, %s96
      %p100 = scmp.eq.s32.totalorder %s13, 0
      %p101 = por %p99, %p100
      %p102 = scmp.ne.s32.totalorder %s94, %s96
      %p103 = scmp.eq.s32.totalorder %s18, 1
      %p104 = por %p102, %p103
      %p105 = scmp.ne.s32.totalorder %s96, %s97
      %p106 = scmp.eq.s32.totalorder %s18, 0
      %p107 = por %p105, %p106
      %p108 = scmp.ne.s32.totalorder %s96, %s97
      %p109 = scmp.eq.s32.totalorder %s19, 1
      %p110 = por %p108, %p109
      %p112 = scmp.ne.s32.totalorder %s97, %s111
      %p113 = scmp.eq.s32.totalorder %s19, 0
      %p114 = por %p112, %p113
      %s115 = ssub.s32 %s13, %s20
      %p116 = scmp.eq.s32.totalorder %s115, 0
      %s118 = sadd.s32 %s117, 1
      %s119 = scalar_select %p116, %s117, %s118
      %p122 = pneg %p116
      %p123 = scmp.eq.s32.totalorder %s13, 1
      %p124 = por %p122, %p123
      %p125 = scmp.ne.s32.totalorder %s117, %s120
      %p126 = scmp.eq.s32.totalorder %s13, 0
      %p127 = por %p125, %p126
      %p128 = scmp.ne.s32.totalorder %s117, %s120
      %p129 = scmp.eq.s32.totalorder %s18, 1
      %p130 = por %p128, %p129
      %p131 = scmp.ne.s32.totalorder %s120, %s121
      %p132 = scmp.eq.s32.totalorder %s18, 0
      %p133 = por %p131, %p132
      %p134 = scmp.ne.s32.totalorder %s120, %s121
      %p135 = scmp.eq.s32.totalorder %s19, 1
      %p136 = por %p134, %p135
      %p138 = scmp.ne.s32.totalorder %s121, %s137
      %p139 = scmp.eq.s32.totalorder %s19, 0
      %p140 = por %p138, %p139
      %p141 = scmp.le.s32.totalorder 1, %s13
      %p142 = scmp.lt.s32.totalorder %s13, 3
      %p143 = pnand %p141, %p142
      %p144 = pneg %p143
      // Predicated region
      $region9: #{tpu_custom_call.1} parent=5 // pred_check
        _
      $region10: #{tpu_custom_call.1} parent=5 // pred_check_branch
        %146 = sbr.rel (%p143) target = $region12
      $region11: #{tpu_custom_call.1} parent=5 // pred_region
        %s147 = ssub.s32 %s13, 1
        // Predicated region
        $region13: #{tpu_custom_call.1} parent=11 // pred_check
          %p148 = pneg %p86
        $region14: #{tpu_custom_call.1} parent=11 // pred_check_branch
          %150 = sbr.rel (%p148) target = $region16
        $region15: #{tpu_custom_call.1} parent=11 // pred_region
          _
        $region16: #{tpu_custom_call.1} parent=11 // pred_fallthru
          _
        // Predicated region
        $region17: #{tpu_custom_call.1} parent=11 // pred_check
          %p151 = pneg %p107
        $region18: #{tpu_custom_call.1} parent=11 // pred_check_branch
          %153 = sbr.rel (%p151) target = $region20
        $region19: #{tpu_custom_call.1} parent=11 // pred_region
          _
        $region20: #{tpu_custom_call.1} parent=11 // pred_fallthru
          _
      $region12: #{tpu_custom_call.1} parent=5 // pred_fallthru
        _
      %p154 = scmp.lt.s32.totalorder %s13, 2
      // Predicated region
      $region21: #{tpu_custom_call.1} parent=5 // pred_check
        %p155 = pneg %p154
      $region22: #{tpu_custom_call.1} parent=5 // pred_check_branch
        %157 = sbr.rel (%p155) target = $region24
      $region23: #{tpu_custom_call.1} parent=5 // pred_region
        // Predicated region
        $region25: #{tpu_custom_call.1} parent=23 // pred_check
          %p158 = pneg %p33
        $region26: #{tpu_custom_call.1} parent=23 // pred_check_branch
          %160 = sbr.rel (%p158) target = $region28
        $region27: #{tpu_custom_call.1} parent=23 // pred_region
          %p161 = scmp.lt.s32.totalorder %s13, 1
          %s162 = scalar_select %p161, %s13, 1
          %s163 = smul.addr %s162, 8
          %s164 = scalar_lea.vmem %s0, %s163
        $region28: #{tpu_custom_call.1} parent=23 // pred_fallthru
          _
        // Predicated region
        $region29: #{tpu_custom_call.1} parent=23 // pred_check
          %p165 = pneg %p59
        $region30: #{tpu_custom_call.1} parent=23 // pred_check_branch
          %167 = sbr.rel (%p165) target = $region32
        $region31: #{tpu_custom_call.1} parent=23 // pred_region
          %p168 = scmp.lt.s32.totalorder %s13, 1
          %s169 = scalar_select %p168, %s13, 1
          %s170 = smul.addr %s169, 8
          %s171 = scalar_lea.vmem %s1, %s170
        $region32: #{tpu_custom_call.1} parent=23 // pred_fallthru
          _
      $region24: #{tpu_custom_call.1} parent=5 // pred_fallthru
        _
      %p172 = scmp.le.s32.totalorder 1, %s13
      %p173 = scmp.lt.s32.totalorder %s13, 3
      %p174 = pnand %p172, %p173
      %p175 = pneg %p174
      // Predicated region
      $region33: #{tpu_custom_call.1} parent=5 // pred_check
        _
      $region34: #{tpu_custom_call.1} parent=5 // pred_check_branch
        %177 = sbr.rel (%p174) target = $region36
      $region35: #{tpu_custom_call.1} parent=5 // pred_region
        %s178 = ssub.s32 %s13, 1
        %p179 = scmp.lt.s32.totalorder %s18, 1
        %s180 = scalar_select %p179, %s18, 1
        %s181 = smul.addr %s180, 8
        %s182 = scalar_lea.vmem %s0, %s181
        %p183 = pneg %p39
        %p184 = pneg %p36
        %p185 = scmp.lt.s32.totalorder %s18, 1
        %s186 = scalar_select %p185, %s18, 1
        %s187 = smul.addr %s186, 8
        %s188 = scalar_lea.vmem %s1, %s187
        %p189 = pneg %p65
        %p190 = pneg %p62
        %p191 = pneg %p86
        %p192 = pneg %p83
        %p193 = pneg %p107
        %p194 = pneg %p104
        %p195 = pneg %p133
        %p196 = pneg %p130
        %s197 = sand.u32 %s120, 1
        %s198 = scalar_lea.sflag [#allocation3], %s197
        %s199 = sand.u32 %s120, 1
        %s200 = smul.addr %s199, 8
        %s201 = scalar_lea.vmem [#allocation2], %s200
        %p202 = scmp.lt.s32.totalorder %s18, 1
        %s203 = scalar_select %p202, %s18, 1
        %s204 = smul.addr %s203, 8
        %s205 = scalar_lea.vmem %s0, %s204
        %p206 = scmp.lt.s32.totalorder %s18, 1
        %s207 = scalar_select %p206, %s18, 1
        %s208 = smul.addr %s207, 8
        %s209 = scalar_lea.vmem %s1, %s208
        %v210 = vld [vmem:[%s205] sm:$0xff]
        %v211 = vld [vmem:[%s209] sm:$0xff]
        %v212 = vld [vmem:[%s2] sm:$0xff]
        %v213 = vld [vmem:[%s2 + $0x8] sm:$0xff]
        %v214 = vld [vmem:[%s2 + $0x10] sm:$0xff]
        %v215 = vld [vmem:[%s2 + $0x18] sm:$0xff]
        %v216 = vld [vmem:[%s2 + $0x20] sm:$0xff]
        %v217 = vld [vmem:[%s2 + $0x28] sm:$0xff]
        %v218 = vld [vmem:[%s2 + $0x30] sm:$0xff]
        %v219 = vld [vmem:[%s2 + $0x38] sm:$0xff]
        %vm220 = vcmask 261120
        %v222 = vsel %vm220, %v211, 0
        %224 = vmatprep.subr.mxu0 0.0
        %225 = vmatpush1.msra.mxu0 0.0
        %226 = vmatprep.subr.mxu0 0.0
        %227 = vmatpush1.msra.mxu0 0.0
        %228 = vmatprep.subr.mxu0 0.0
        %229 = vmatpush1.msra.mxu0 0.0
        %230 = vmatprep.subr.mxu0 0.0
        %231 = vmatpush1.msra.mxu0 0.0
        %232 = vmatprep.subr.mxu0 0.0
        %233 = vmatpush1.msra.mxu0 0.0
        %234 = vmatprep.subr.mxu0 0.0
        %235 = vmatpush1.msra.mxu0 0.0
        %236 = vmatprep.subr.mxu0 0.0
        %237 = vmatpush1.msra.mxu0 0.0
        %238 = vmatprep.subr.mxu0 0.0
        %239 = vmatpush1.msra.mxu0 0.0
        %240 = vmatprep.subr.mxu0 0.0
        %241 = vmatpush1.msra.mxu0 0.0
        %242 = vmatprep.subr.mxu0 0.0
        %243 = vmatpush1.msra.mxu0 0.0
        %244 = vmatprep.subr.mxu0 0.0
        %245 = vmatpush1.msra.mxu0 0.0
        %246 = vmatprep.subr.mxu0 0.0
        %247 = vmatpush1.msra.mxu0 0.0
        %248 = vmatprep.subr.mxu0 0.0
        %249 = vmatpush1.msra.mxu0 %v219
        %250 = vmatprep.subr.mxu0 0.0
        %251 = vmatpush1.msra.mxu0 %v218
        %252 = vmatprep.subr.mxu0 0.0
        %253 = vmatpush1.msra.mxu0 %v217
        %254 = vmatprep.subr.mxu0 0.0
        %255 = vmatpush1.msra.mxu0 %v216
        %256 = vmatprep.subr.mxu0 0.0
        %257 = vmatpush2.msra.mxu0 0.0
        %258 = vmatprep.subr.mxu0 0.0
        %259 = vmatpush2.msra.mxu0 0.0
        %260 = vmatprep.subr.mxu0 0.0
        %261 = vmatpush2.msra.mxu0 0.0
        %262 = vmatprep.subr.mxu0 0.0
        %263 = vmatpush2.msra.mxu0 0.0
        %264 = vmatprep.subr.mxu0 0.0
        %265 = vmatpush2.msra.mxu0 0.0
        %266 = vmatprep.subr.mxu0 0.0
        %267 = vmatpush2.msra.mxu0 0.0
        %268 = vmatprep.subr.mxu0 0.0
        %269 = vmatpush2.msra.mxu0 0.0
        %270 = vmatprep.subr.mxu0 0.0
        %271 = vmatpush2.msra.mxu0 0.0
        %272 = vmatprep.subr.mxu0 0.0
        %273 = vmatpush2.msra.mxu0 0.0
        %274 = vmatprep.subr.mxu0 0.0
        %275 = vmatpush2.msra.mxu0 0.0
        %276 = vmatprep.subr.mxu0 0.0
        %277 = vmatpush2.msra.mxu0 0.0
        %278 = vmatprep.subr.mxu0 0.0
        %279 = vmatpush2.msra.mxu0 0.0
        %280 = vmatprep.subr.mxu0 0.0
        %281 = vmatpush2.msra.mxu0 0.0
        %282 = vmatprep.subr.mxu0 0.0
        %283 = vmatpush2.msra.mxu0 0.0
        %284 = vmatprep.subr.mxu0 0.0
        %285 = vmatpush2.msra.mxu0 0.0
        %286 = vmatprep.subr.mxu0 0.0
        %287 = vmatpush2.msra.mxu0 0.0
        %288 = vmatprep.mubr.f32.mxu0 0.0
        %289 = vmatmul.mubr.f32.gmra.mxu0 %v222
        %v290 = vpop.f32.mrf.mxu0
        %v291 = vadd.f32 0.0, %v290
        %v292 = vpop.f32.mrf.mxu0
        %293 = vdwg.mxu0
        %v295 = vsel %vm220, %v210, 0
        %297 = vmatprep.subr.mxu0 0.0
        %298 = vmatpush1.msra.mxu0 0.0
        %299 = vmatprep.subr.mxu0 0.0
        %300 = vmatpush1.msra.mxu0 0.0
        %301 = vmatprep.subr.mxu0 0.0
        %302 = vmatpush1.msra.mxu0 0.0
        %303 = vmatprep.subr.mxu0 0.0
        %304 = vmatpush1.msra.mxu0 0.0
        %305 = vmatprep.subr.mxu0 0.0
        %306 = vmatpush1.msra.mxu0 0.0
        %307 = vmatprep.subr.mxu0 0.0
        %308 = vmatpush1.msra.mxu0 0.0
        %309 = vmatprep.subr.mxu0 0.0
        %310 = vmatpush1.msra.mxu0 0.0
        %311 = vmatprep.subr.mxu0 0.0
        %312 = vmatpush1.msra.mxu0 0.0
        %313 = vmatprep.subr.mxu0 0.0
        %314 = vmatpush1.msra.mxu0 0.0
        %315 = vmatprep.subr.mxu0 0.0
        %316 = vmatpush1.msra.mxu0 0.0
        %317 = vmatprep.subr.mxu0 0.0
        %318 = vmatpush1.msra.mxu0 0.0
        %319 = vmatprep.subr.mxu0 0.0
        %320 = vmatpush1.msra.mxu0 0.0
        %321 = vmatprep.subr.mxu0 0.0
        %322 = vmatpush1.msra.mxu0 %v215
        %323 = vmatprep.subr.mxu0 0.0
        %324 = vmatpush1.msra.mxu0 %v214
        %325 = vmatprep.subr.mxu0 0.0
        %326 = vmatpush1.msra.mxu0 %v213
        %327 = vmatprep.subr.mxu0 0.0
        %328 = vmatpush1.msra.mxu0 %v212
        %329 = vmatprep.subr.mxu0 0.0
        %330 = vmatpush2.msra.mxu0 0.0
        %331 = vmatprep.subr.mxu0 0.0
        %332 = vmatpush2.msra.mxu0 0.0
        %333 = vmatprep.subr.mxu0 0.0
        %334 = vmatpush2.msra.mxu0 0.0
        %335 = vmatprep.subr.mxu0 0.0
        %336 = vmatpush2.msra.mxu0 0.0
        %337 = vmatprep.subr.mxu0 0.0
        %338 = vmatpush2.msra.mxu0 0.0
        %339 = vmatprep.subr.mxu0 0.0
        %340 = vmatpush2.msra.mxu0 0.0
        %341 = vmatprep.subr.mxu0 0.0
        %342 = vmatpush2.msra.mxu0 0.0
        %343 = vmatprep.subr.mxu0 0.0
        %344 = vmatpush2.msra.mxu0 0.0
        %345 = vmatprep.subr.mxu0 0.0
        %346 = vmatpush2.msra.mxu0 0.0
        %347 = vmatprep.subr.mxu0 0.0
        %348 = vmatpush2.msra.mxu0 0.0
        %349 = vmatprep.subr.mxu0 0.0
        %350 = vmatpush2.msra.mxu0 0.0
        %351 = vmatprep.subr.mxu0 0.0
        %352 = vmatpush2.msra.mxu0 0.0
        %353 = vmatprep.subr.mxu0 0.0
        %354 = vmatpush2.msra.mxu0 0.0
        %355 = vmatprep.subr.mxu0 0.0
        %356 = vmatpush2.msra.mxu0 0.0
        %357 = vmatprep.subr.mxu0 0.0
        %358 = vmatpush2.msra.mxu0 0.0
        %359 = vmatprep.subr.mxu0 0.0
        %360 = vmatpush2.msra.mxu0 0.0
        %361 = vmatprep.mubr.f32.mxu0 0.0
        %362 = vmatmul.mubr.f32.gmra.mxu0 %v295
        %v363 = vpop.f32.mrf.mxu0
        %v364 = vadd.f32 %v291, %v363
        %v365 = vpop.f32.mrf.mxu0
        %366 = vdwg.mxu0
        %v367 = vld [vmem:[%s3] sm:$0x1]
        %v368 = vlaneseq
        %v369 = vshrl.u32 %v368, 7
        %v370 = vsub.s32 0, %v369
        %v371 = vrot.slane %v367, %v370
        %v372 = vadd.f32 %v364, %v371
        %v373 = vxor.u32 %v372, 2147483648
        %v374 = vmul.f32 %v373, 1.442695
        %v375 = vpow.pop %v374
        %v376 = vadd.f32 %v375, 1.0
        %v377 = vrcp.pop %v376
        %v378 = vmul.f32 1.0, %v377
        %v379 = vld [vmem:[%s2 + $0x40] sm:$0xff]
        %v380 = vld [vmem:[%s2 + $0x48] sm:$0xff]
        %v381 = vld [vmem:[%s2 + $0x50] sm:$0xff]
        %v382 = vld [vmem:[%s2 + $0x58] sm:$0xff]
        %v383 = vld [vmem:[%s2 + $0x60] sm:$0xff]
        %v384 = vld [vmem:[%s2 + $0x68] sm:$0xff]
        %v385 = vld [vmem:[%s2 + $0x70] sm:$0xff]
        %v386 = vld [vmem:[%s2 + $0x78] sm:$0xff]
        %387 = vmatprep.subr.mxu0 0.0
        %388 = vmatpush1.msra.mxu0 0.0
        %389 = vmatprep.subr.mxu0 0.0
        %390 = vmatpush1.msra.mxu0 0.0
        %391 = vmatprep.subr.mxu0 0.0
        %392 = vmatpush1.msra.mxu0 0.0
        %393 = vmatprep.subr.mxu0 0.0
        %394 = vmatpush1.msra.mxu0 0.0
        %395 = vmatprep.subr.mxu0 0.0
        %396 = vmatpush1.msra.mxu0 0.0
        %397 = vmatprep.subr.mxu0 0.0
        %398 = vmatpush1.msra.mxu0 0.0
        %399 = vmatprep.subr.mxu0 0.0
        %400 = vmatpush1.msra.mxu0 0.0
        %401 = vmatprep.subr.mxu0 0.0
        %402 = vmatpush1.msra.mxu0 0.0
        %403 = vmatprep.subr.mxu0 0.0
        %404 = vmatpush1.msra.mxu0 0.0
        %405 = vmatprep.subr.mxu0 0.0
        %406 = vmatpush1.msra.mxu0 0.0
        %407 = vmatprep.subr.mxu0 0.0
        %408 = vmatpush1.msra.mxu0 0.0
        %409 = vmatprep.subr.mxu0 0.0
        %410 = vmatpush1.msra.mxu0 0.0
        %411 = vmatprep.subr.mxu0 0.0
        %412 = vmatpush1.msra.mxu0 %v386
        %413 = vmatprep.subr.mxu0 0.0
        %414 = vmatpush1.msra.mxu0 %v385
        %415 = vmatprep.subr.mxu0 0.0
        %416 = vmatpush1.msra.mxu0 %v384
        %417 = vmatprep.subr.mxu0 0.0
        %418 = vmatpush1.msra.mxu0 %v383
        %419 = vmatprep.subr.mxu0 0.0
        %420 = vmatpush2.msra.mxu0 0.0
        %421 = vmatprep.subr.mxu0 0.0
        %422 = vmatpush2.msra.mxu0 0.0
        %423 = vmatprep.subr.mxu0 0.0
        %424 = vmatpush2.msra.mxu0 0.0
        %425 = vmatprep.subr.mxu0 0.0
        %426 = vmatpush2.msra.mxu0 0.0
        %427 = vmatprep.subr.mxu0 0.0
        %428 = vmatpush2.msra.mxu0 0.0
        %429 = vmatprep.subr.mxu0 0.0
        %430 = vmatpush2.msra.mxu0 0.0
        %431 = vmatprep.subr.mxu0 0.0
        %432 = vmatpush2.msra.mxu0 0.0
        %433 = vmatprep.subr.mxu0 0.0
        %434 = vmatpush2.msra.mxu0 0.0
        %435 = vmatprep.subr.mxu0 0.0
        %436 = vmatpush2.msra.mxu0 0.0
        %437 = vmatprep.subr.mxu0 0.0
        %438 = vmatpush2.msra.mxu0 0.0
        %439 = vmatprep.subr.mxu0 0.0
        %440 = vmatpush2.msra.mxu0 0.0
        %441 = vmatprep.subr.mxu0 0.0
        %442 = vmatpush2.msra.mxu0 0.0
        %443 = vmatprep.subr.mxu0 0.0
        %444 = vmatpush2.msra.mxu0 0.0
        %445 = vmatprep.subr.mxu0 0.0
        %446 = vmatpush2.msra.mxu0 0.0
        %447 = vmatprep.subr.mxu0 0.0
        %448 = vmatpush2.msra.mxu0 0.0
        %449 = vmatprep.subr.mxu0 0.0
        %450 = vmatpush2.msra.mxu0 0.0
        %451 = vmatprep.mubr.f32.mxu0 0.0
        %452 = vmatmul.mubr.f32.gmra.mxu0 %v222
        %v453 = vpop.f32.mrf.mxu0
        %v454 = vadd.f32 0.0, %v453
        %v455 = vpop.f32.mrf.mxu0
        %456 = vdwg.mxu0
        %457 = vmatprep.subr.mxu0 0.0
        %458 = vmatpush1.msra.mxu0 0.0
        %459 = vmatprep.subr.mxu0 0.0
        %460 = vmatpush1.msra.mxu0 0.0
        %461 = vmatprep.subr.mxu0 0.0
        %462 = vmatpush1.msra.mxu0 0.0
        %463 = vmatprep.subr.mxu0 0.0
        %464 = vmatpush1.msra.mxu0 0.0
        %465 = vmatprep.subr.mxu0 0.0
        %466 = vmatpush1.msra.mxu0 0.0
        %467 = vmatprep.subr.mxu0 0.0
        %468 = vmatpush1.msra.mxu0 0.0
        %469 = vmatprep.subr.mxu0 0.0
        %470 = vmatpush1.msra.mxu0 0.0
        %471 = vmatprep.subr.mxu0 0.0
        %472 = vmatpush1.msra.mxu0 0.0
        %473 = vmatprep.subr.mxu0 0.0
        %474 = vmatpush1.msra.mxu0 0.0
        %475 = vmatprep.subr.mxu0 0.0
        %476 = vmatpush1.msra.mxu0 0.0
        %477 = vmatprep.subr.mxu0 0.0
        %478 = vmatpush1.msra.mxu0 0.0
        %479 = vmatprep.subr.mxu0 0.0
        %480 = vmatpush1.msra.mxu0 0.0
        %481 = vmatprep.subr.mxu0 0.0
        %482 = vmatpush1.msra.mxu0 %v382
        %483 = vmatprep.subr.mxu0 0.0
        %484 = vmatpush1.msra.mxu0 %v381
        %485 = vmatprep.subr.mxu0 0.0
        %486 = vmatpush1.msra.mxu0 %v380
        %487 = vmatprep.subr.mxu0 0.0
        %488 = vmatpush1.msra.mxu0 %v379
        %489 = vmatprep.subr.mxu0 0.0
        %490 = vmatpush2.msra.mxu0 0.0
        %491 = vmatprep.subr.mxu0 0.0
        %492 = vmatpush2.msra.mxu0 0.0
        %493 = vmatprep.subr.mxu0 0.0
        %494 = vmatpush2.msra.mxu0 0.0
        %495 = vmatprep.subr.mxu0 0.0
        %496 = vmatpush2.msra.mxu0 0.0
        %497 = vmatprep.subr.mxu0 0.0
        %498 = vmatpush2.msra.mxu0 0.0
        %499 = vmatprep.subr.mxu0 0.0
        %500 = vmatpush2.msra.mxu0 0.0
        %501 = vmatprep.subr.mxu0 0.0
        %502 = vmatpush2.msra.mxu0 0.0
        %503 = vmatprep.subr.mxu0 0.0
        %504 = vmatpush2.msra.mxu0 0.0
        %505 = vmatprep.subr.mxu0 0.0
        %506 = vmatpush2.msra.mxu0 0.0
        %507 = vmatprep.subr.mxu0 0.0
        %508 = vmatpush2.msra.mxu0 0.0
        %509 = vmatprep.subr.mxu0 0.0
        %510 = vmatpush2.msra.mxu0 0.0
        %511 = vmatprep.subr.mxu0 0.0
        %512 = vmatpush2.msra.mxu0 0.0
        %513 = vmatprep.subr.mxu0 0.0
        %514 = vmatpush2.msra.mxu0 0.0
        %515 = vmatprep.subr.mxu0 0.0
        %516 = vmatpush2.msra.mxu0 0.0
        %517 = vmatprep.subr.mxu0 0.0
        %518 = vmatpush2.msra.mxu0 0.0
        %519 = vmatprep.subr.mxu0 0.0
        %520 = vmatpush2.msra.mxu0 0.0
        %521 = vmatprep.mubr.f32.mxu0 0.0
        %522 = vmatmul.mubr.f32.gmra.mxu0 %v295
        %v523 = vpop.f32.mrf.mxu0
        %v524 = vadd.f32 %v454, %v523
        %v525 = vpop.f32.mrf.mxu0
        %526 = vdwg.mxu0
        %v527 = vld [vmem:[%s3 + $0x1] sm:$0x1]
        %v528 = vlaneseq
        %v529 = vshrl.u32 %v528, 7
        %v530 = vsub.s32 0, %v529
        %v531 = vrot.slane %v527, %v530
        %v532 = vadd.f32 %v524, %v531
        %v533 = vxor.u32 %v532, 2147483648
        %v534 = vmul.f32 %v533, 1.442695
        %v535 = vpow.pop %v534
        %v536 = vadd.f32 %v535, 1.0
        %v537 = vrcp.pop %v536
        %v538 = vmul.f32 1.0, %v537
        %v539 = vld [vmem:[%s2 + $0x80] sm:$0xff]
        %v540 = vld [vmem:[%s2 + $0x88] sm:$0xff]
        %v541 = vld [vmem:[%s2 + $0x90] sm:$0xff]
        %v542 = vld [vmem:[%s2 + $0x98] sm:$0xff]
        %v543 = vld [vmem:[%s3 + $0x2] sm:$0x1]
        %v544 = vlaneseq
        %v545 = vshrl.u32 %v544, 7
        %v546 = vsub.s32 0, %v545
        %v547 = vrot.slane %v543, %v546
        %548 = vmatprep.subr.mxu0 0.0
        %549 = vmatpush1.msra.mxu0 0.0
        %550 = vmatprep.subr.mxu0 0.0
        %551 = vmatpush1.msra.mxu0 0.0
        %552 = vmatprep.subr.mxu0 0.0
        %553 = vmatpush1.msra.mxu0 0.0
        %554 = vmatprep.subr.mxu0 0.0
        %555 = vmatpush1.msra.mxu0 0.0
        %556 = vmatprep.subr.mxu0 0.0
        %557 = vmatpush1.msra.mxu0 0.0
        %558 = vmatprep.subr.mxu0 0.0
        %559 = vmatpush1.msra.mxu0 0.0
        %560 = vmatprep.subr.mxu0 0.0
        %561 = vmatpush1.msra.mxu0 0.0
        %562 = vmatprep.subr.mxu0 0.0
        %563 = vmatpush1.msra.mxu0 0.0
        %564 = vmatprep.subr.mxu0 0.0
        %565 = vmatpush1.msra.mxu0 0.0
        %566 = vmatprep.subr.mxu0 0.0
        %567 = vmatpush1.msra.mxu0 0.0
        %568 = vmatprep.subr.mxu0 0.0
        %569 = vmatpush1.msra.mxu0 0.0
        %570 = vmatprep.subr.mxu0 0.0
        %571 = vmatpush1.msra.mxu0 0.0
        %572 = vmatprep.subr.mxu0 0.0
        %573 = vmatpush1.msra.mxu0 %v542
        %574 = vmatprep.subr.mxu0 0.0
        %575 = vmatpush1.msra.mxu0 %v541
        %576 = vmatprep.subr.mxu0 0.0
        %577 = vmatpush1.msra.mxu0 %v540
        %578 = vmatprep.subr.mxu0 0.0
        %579 = vmatpush1.msra.mxu0 %v539
        %580 = vmatprep.subr.mxu0 0.0
        %581 = vmatpush2.msra.mxu0 0.0
        %582 = vmatprep.subr.mxu0 0.0
        %583 = vmatpush2.msra.mxu0 0.0
        %584 = vmatprep.subr.mxu0 0.0
        %585 = vmatpush2.msra.mxu0 0.0
        %586 = vmatprep.subr.mxu0 0.0
        %587 = vmatpush2.msra.mxu0 0.0
        %588 = vmatprep.subr.mxu0 0.0
        %589 = vmatpush2.msra.mxu0 0.0
        %590 = vmatprep.subr.mxu0 0.0
        %591 = vmatpush2.msra.mxu0 0.0
        %592 = vmatprep.subr.mxu0 0.0
        %593 = vmatpush2.msra.mxu0 0.0
        %594 = vmatprep.subr.mxu0 0.0
        %595 = vmatpush2.msra.mxu0 0.0
        %596 = vmatprep.subr.mxu0 0.0
        %597 = vmatpush2.msra.mxu0 0.0
        %598 = vmatprep.subr.mxu0 0.0
        %599 = vmatpush2.msra.mxu0 0.0
        %600 = vmatprep.subr.mxu0 0.0
        %601 = vmatpush2.msra.mxu0 0.0
        %602 = vmatprep.subr.mxu0 0.0
        %603 = vmatpush2.msra.mxu0 0.0
        %604 = vmatprep.subr.mxu0 0.0
        %605 = vmatpush2.msra.mxu0 0.0
        %606 = vmatprep.subr.mxu0 0.0
        %607 = vmatpush2.msra.mxu0 0.0
        %608 = vmatprep.subr.mxu0 0.0
        %609 = vmatpush2.msra.mxu0 0.0
        %610 = vmatprep.subr.mxu0 0.0
        %611 = vmatpush2.msra.mxu0 0.0
        %612 = vmatprep.mubr.f32.mxu0 0.0
        %613 = vmatmul.mubr.f32.gmra.mxu0 %v295
        %v614 = vpop.f32.mrf.mxu0
        %v615 = vadd.f32 %v547, %v614
        %v616 = vpop.f32.mrf.mxu0
        %617 = vdwg.mxu0
        %v618 = vld [vmem:[%s2 + $0xa0] sm:$0xff]
        %v619 = vld [vmem:[%s2 + $0xa8] sm:$0xff]
        %v620 = vld [vmem:[%s2 + $0xb0] sm:$0xff]
        %v621 = vld [vmem:[%s2 + $0xb8] sm:$0xff]
        %v622 = vld [vmem:[%s3 + $0x3] sm:$0x1]
        %v623 = vlaneseq
        %v624 = vshrl.u32 %v623, 7
        %v625 = vsub.s32 0, %v624
        %v626 = vrot.slane %v622, %v625
        %627 = vmatprep.subr.mxu0 0.0
        %628 = vmatpush1.msra.mxu0 0.0
        %629 = vmatprep.subr.mxu0 0.0
        %630 = vmatpush1.msra.mxu0 0.0
        %631 = vmatprep.subr.mxu0 0.0
        %632 = vmatpush1.msra.mxu0 0.0
        %633 = vmatprep.subr.mxu0 0.0
        %634 = vmatpush1.msra.mxu0 0.0
        %635 = vmatprep.subr.mxu0 0.0
        %636 = vmatpush1.msra.mxu0 0.0
        %637 = vmatprep.subr.mxu0 0.0
        %638 = vmatpush1.msra.mxu0 0.0
        %639 = vmatprep.subr.mxu0 0.0
        %640 = vmatpush1.msra.mxu0 0.0
        %641 = vmatprep.subr.mxu0 0.0
        %642 = vmatpush1.msra.mxu0 0.0
        %643 = vmatprep.subr.mxu0 0.0
        %644 = vmatpush1.msra.mxu0 0.0
        %645 = vmatprep.subr.mxu0 0.0
        %646 = vmatpush1.msra.mxu0 0.0
        %647 = vmatprep.subr.mxu0 0.0
        %648 = vmatpush1.msra.mxu0 0.0
        %649 = vmatprep.subr.mxu0 0.0
        %650 = vmatpush1.msra.mxu0 0.0
        %651 = vmatprep.subr.mxu0 0.0
        %652 = vmatpush1.msra.mxu0 %v621
        %653 = vmatprep.subr.mxu0 0.0
        %654 = vmatpush1.msra.mxu0 %v620
        %655 = vmatprep.subr.mxu0 0.0
        %656 = vmatpush1.msra.mxu0 %v619
        %657 = vmatprep.subr.mxu0 0.0
        %658 = vmatpush1.msra.mxu0 %v618
        %659 = vmatprep.subr.mxu0 0.0
        %660 = vmatpush2.msra.mxu0 0.0
        %661 = vmatprep.subr.mxu0 0.0
        %662 = vmatpush2.msra.mxu0 0.0
        %663 = vmatprep.subr.mxu0 0.0
        %664 = vmatpush2.msra.mxu0 0.0
        %665 = vmatprep.subr.mxu0 0.0
        %666 = vmatpush2.msra.mxu0 0.0
        %667 = vmatprep.subr.mxu0 0.0
        %668 = vmatpush2.msra.mxu0 0.0
        %669 = vmatprep.subr.mxu0 0.0
        %670 = vmatpush2.msra.mxu0 0.0
        %671 = vmatprep.subr.mxu0 0.0
        %672 = vmatpush2.msra.mxu0 0.0
        %673 = vmatprep.subr.mxu0 0.0
        %674 = vmatpush2.msra.mxu0 0.0
        %675 = vmatprep.subr.mxu0 0.0
        %676 = vmatpush2.msra.mxu0 0.0
        %677 = vmatprep.subr.mxu0 0.0
        %678 = vmatpush2.msra.mxu0 0.0
        %679 = vmatprep.subr.mxu0 0.0
        %680 = vmatpush2.msra.mxu0 0.0
        %681 = vmatprep.subr.mxu0 0.0
        %682 = vmatpush2.msra.mxu0 0.0
        %683 = vmatprep.subr.mxu0 0.0
        %684 = vmatpush2.msra.mxu0 0.0
        %685 = vmatprep.subr.mxu0 0.0
        %686 = vmatpush2.msra.mxu0 0.0
        %687 = vmatprep.subr.mxu0 0.0
        %688 = vmatpush2.msra.mxu0 0.0
        %689 = vmatprep.subr.mxu0 0.0
        %690 = vmatpush2.msra.mxu0 0.0
        %691 = vmatprep.mubr.f32.mxu0 0.0
        %692 = vmatmul.mubr.f32.gmra.mxu0 %v222
        %v693 = vpop.f32.mrf.mxu0
        %v694 = vadd.f32 %v626, %v693
        %v695 = vpop.f32.mrf.mxu0
        %696 = vdwg.mxu0
        %v697 = vmul.f32 %v378, %v694
        %v698 = vadd.f32 %v615, %v697
        %v699 = vtanh.pop %v698
        %v700 = vsub.f32 %v211, %v699
        %v701 = vmul.f32 %v538, %v700
        %v702 = vadd.f32 %v699, %v701
        %v703 = vsel %vm220, %v702, 0.0
        %704 = vadd.xlane.f32.xlu0 %v703
        %v705 = vpop.xlane.xlu0 %704
        %v706 = vrcp.pop 32.0
        %v707 = vmul.f32 %v705, %v706
        %v708 = vsub.f32 %v702, %v707
        %v709 = vmul.f32 %v708, %v708
        %v710 = vsel %vm220, %v709, 0.0
        %711 = vadd.xlane.f32.xlu0 %v710
        %v712 = vpop.xlane.xlu0 %711
        %v713 = vmul.f32 %v712, %v706
        %v714 = vadd.f32 %v713, 1e-05
        %v715 = vrsqrt.pop %v714
        %v716 = vmul.f32 %v708, %v715
        %v717 = vld [vmem:[%s3 + $0x4] sm:$0x1]
        %v718 = vlaneseq
        %v719 = vshrl.u32 %v718, 7
        %v720 = vsub.s32 0, %v719
        %v721 = vrot.slane %v717, %v720
        %v722 = vmul.f32 %v716, %v721
        %v723 = vld [vmem:[%s3 + $0x5] sm:$0x1]
        %v724 = vlaneseq
        %v725 = vshrl.u32 %v724, 7
        %v726 = vsub.s32 0, %v725
        %v727 = vrot.slane %v723, %v726
        %v728 = vadd.f32 %v722, %v727
        %729 = vst.msk [vmem:[%s201] sm:$0xff] %vm220, %v728
        %s730 = sand.u32 %s120, 1
        %s731 = scalar_lea.sflag [#allocation3], %s730
        %s732 = sand.u32 %s120, 1
        %s733 = smul.addr %s732, 8
        %s734 = scalar_lea.vmem [#allocation2], %s733
        // Predicated region
        $region37: #{tpu_custom_call.1} parent=35 // pred_check
          %p735 = pneg %p130
        $region38: #{tpu_custom_call.1} parent=35 // pred_check_branch
          %737 = sbr.rel (%p735) target = $region40
        $region39: #{tpu_custom_call.1} parent=35 // pred_region
          %s739 = ssub.s32 128, 128
          %740 = vsyncadd %s731, %s739
          %s741 = smul.addr %s18, 128
          %s742 = scalar_lea.hbm %s4, %s741
          %s744 = sshll.u32 %s734, 4
          %s745 = int_to_ptr.vmem [resolvable:$true] %s744
          %747 = dma.vmem_to_hbm [thread:$0]  %s745, 128, %s742, %s731
        $region40: #{tpu_custom_call.1} parent=35 // pred_fallthru
          _
      $region36: #{tpu_custom_call.1} parent=5 // pred_fallthru
        _
      %p748 = scmp.le.s32.totalorder 2, %s13
      // Predicated region
      $region41: #{tpu_custom_call.1} parent=5 // pred_check
        %p749 = pneg %p748
      $region42: #{tpu_custom_call.1} parent=5 // pred_check_branch
        %751 = sbr.rel (%p749) target = $region44
      $region43: #{tpu_custom_call.1} parent=5 // pred_region
        %s752 = ssub.s32 %s13, 2
        // Predicated region
        $region45: #{tpu_custom_call.1} parent=43 // pred_check
          %p753 = pneg %p136
        $region46: #{tpu_custom_call.1} parent=43 // pred_check_branch
          %755 = sbr.rel (%p753) target = $region48
        $region47: #{tpu_custom_call.1} parent=43 // pred_region
          %s756 = sand.u32 %s121, 1
          %s757 = scalar_lea.sflag [#allocation3], %s756
          %s758 = sand.u32 %s121, 1
          %s759 = smul.addr %s758, 8
          %s760 = scalar_lea.vmem [#allocation2], %s759
          %761 = dma.done %s757, 128
        $region48: #{tpu_custom_call.1} parent=43 // pred_fallthru
          _
      $region44: #{tpu_custom_call.1} parent=5 // pred_fallthru
        _
    $region6: #{tpu_custom_call.1} parent=1 // loop_footer
      %s17 = sadd.s32 1, %s13
    $region7: #{tpu_custom_call.1} parent=1 // loop_footer_branch
      %12 = sbr.rel target = $region3
    $region8: #{tpu_custom_call.1} parent=1 // loop_exit
      _
    %762 = vsyncpa [#allocation3], 1
    %s763 = scalar_lea.sflag [#allocation3], 1
    %764 = vsyncpa %s763, 1

</llo_original>
